<compile_context>
chip_gen: v5e
topology: v5e:2x2
jax: 0.10.0
libtpu: 0.0.40
codegen_flags: <defaults>
</compile_context>

<pallas_src>
import jax
import jax.numpy as jnp
from jax.experimental import pallas as pl
from jax.experimental.pallas import tpu as pltpu


# ---------------------------------------------------------------------------
# Kernel 1: single-step GRU (small, ungridded, latency-bound -> 3 MXU pushes)
# ---------------------------------------------------------------------------
def gru_step_kernel(x_ref, h_ref, ctx_ref,
                    wx_ref, wc_ref, wh_ref,
                    b_i_ref, b_h_ref,
                    h_out_ref):
    H = h_ref.shape[1]
    x = x_ref[...]          # (B, E)   embedded target token
    h = h_ref[...]          # (B, H)   last hidden state h[-1]
    ctx = ctx_ref[...]      # (B, 2H)  uniform-attention context (precomputed)

    # One dot per source; gates sliced at H boundaries (PyTorch order r,z,n).
    gi = (jnp.dot(x, wx_ref[...], preferred_element_type=jnp.float32)
          + jnp.dot(ctx, wc_ref[...], preferred_element_type=jnp.float32)
          + b_i_ref[...])
    gh = jnp.dot(h, wh_ref[...], preferred_element_type=jnp.float32) + b_h_ref[...]

    r = jax.nn.sigmoid(gi[:, :H] + gh[:, :H])
    z = jax.nn.sigmoid(gi[:, H:2 * H] + gh[:, H:2 * H])
    n = jnp.tanh(gi[:, 2 * H:] + r * gh[:, 2 * H:])
    h_out_ref[...] = ((1.0 - z) * n + z * h).astype(h_out_ref.dtype)


# ---------------------------------------------------------------------------
# Kernel 2: vocab projection, gridded over vocab tiles (the dominant work).
# Single merged weight stream, bias added in the wrapper.
# ---------------------------------------------------------------------------
def out_proj_kernel(act_ref, w_ref, logits_ref):
    logits_ref[...] = jnp.dot(act_ref[...], w_ref[...],
                              preferred_element_type=jnp.float32)


def _pick_v_tile(V, K, itemsize, budget):
    """Vocab tile width: lane-aligned, sized so one (K, TV) weight tile is
    ~`budget` bytes (double-buffered it stays well inside every chip's VMEM,
    including v7x's 64 MiB physical)."""
    tv = (budget // max(1, K * itemsize)) // 128 * 128
    tv = max(128, tv)
    v128 = pl.cdiv(V, 128) * 128
    return v128 if tv >= v128 else tv


# ---------------------------------------------------------------------------
# One-time parameter preparation (hoisted out of the per-step forward)
# ---------------------------------------------------------------------------
def prepare_decoder_params(params, proj_dtype=jnp.bfloat16,
                           v_tile_budget_bytes=8 << 20):
    """Split / transpose / cast the PyTorch-layout weights once.

    The attn Linear (attn_w / attn_b) is intentionally dropped: it feeds a
    softmax over a single logit and therefore cannot affect the output
    (attention is exactly uniform).  The vocab-projection weight is stored
    in `proj_dtype` (bf16 by default) since that GEMV is HBM-bandwidth bound.
    """
    H = params["gru_w_hh"].shape[1]
    E = params["gru_w_ih"].shape[1] - 2 * H
    w_ih = params["gru_w_ih"]      # (3H, E + 2H), gate order r, z, n
    w_hh = params["gru_w_hh"]      # (3H, H)

    # Merged, pre-transposed GRU weights: one dot per source inside kernel 1.
    wx = jnp.asarray(w_ih[:, :E].T)                 # (E, 3H)
    wc = jnp.asarray(w_ih[:, E:].T)                 # (2H, 3H)
    wh = jnp.asarray(w_hh.T)                        # (H, 3H)

    # Output projection: single (3H, V) weight (rows = [hidden | context]),
    # padded on V to a whole number of lane-aligned tiles, cast to proj_dtype.
    out_w = jnp.asarray(params["out_w"].T)          # (3H, V)
    V = out_w.shape[1]
    itemsize = jnp.dtype(proj_dtype).itemsize
    TV = _pick_v_tile(V, 3 * H, itemsize, v_tile_budget_bytes)
    Vp = pl.cdiv(V, TV) * TV
    if Vp != V:
        out_w = jnp.pad(out_w, ((0, 0), (0, Vp - V)))
    out_w = out_w.astype(proj_dtype)

    return {
        "embedding": params["embedding"],
        "wx": wx, "wc": wc, "wh": wh,
        "b_i": params["gru_b_ih"].reshape(1, 3 * H),
        "b_h": params["gru_b_hh"].reshape(1, 3 * H),
        "out_w": out_w,                             # (3H, Vp) in proj_dtype
        "out_b": jnp.asarray(params["out_b"], jnp.float32),  # (V,)
        "v": V, "tv": TV,
    }


# ---------------------------------------------------------------------------
# Forward pass
# ---------------------------------------------------------------------------
def decoder_forward(x_tokens, h, encoder_out, prepared):
    """x_tokens: (B, 1) int32, h: (n_layers, B, H), encoder_out: (B, L, 2H)."""
    B, L, _ = encoder_out.shape
    H = h.shape[-1]
    V = prepared["v"]
    TV = prepared["tv"]
    Vp = prepared["out_w"].shape[1]

    # Glue that stays in the wrapper (trivial vs. the weight stream):
    #  - nn.Embedding lookup (gather)
    #  - uniform-attention context = mean over encoder positions (the PyTorch
    #    double softmax is provably uniform), so (B, L, 2H) never hits VMEM.
    x_emb = prepared["embedding"][x_tokens[:, 0]]               # (B, E)
    last_hidden = h[-1]                                         # (B, H)
    # TODO(synk): only a single GRU layer is supported (matches n_layers=1).
    ctx = jnp.mean(encoder_out, axis=1)                         # (B, 2H)

    # Pad batch to a multiple of 8 sublanes (tiny; encoder_out not padded).
    Bp = ((B + 7) // 8) * 8
    pad = Bp - B
    if pad:
        x_emb = jnp.pad(x_emb, ((0, pad), (0, 0)))
        last_hidden = jnp.pad(last_hidden, ((0, pad), (0, 0)))
        ctx = jnp.pad(ctx, ((0, pad), (0, 0)))

    # ---- kernel 1: GRU step (everything resident in VMEM) ------------------
    vmem = pl.BlockSpec(memory_space=pltpu.MemorySpace.VMEM)
    gru_inputs = (x_emb, last_hidden, ctx,
                  prepared["wx"], prepared["wc"], prepared["wh"],
                  prepared["b_i"], prepared["b_h"])
    h_new = pl.pallas_call(
        gru_step_kernel,
        out_shape=jax.ShapeDtypeStruct((Bp, H), jnp.float32),
        in_specs=[vmem] * len(gru_inputs),
        out_specs=vmem,
    )(*gru_inputs)

    # ---- kernel 2: vocab projection, tiled & parallel over V ---------------
    w = prepared["out_w"]                                       # (3H, Vp)
    act = jnp.concatenate([h_new, ctx], axis=1).astype(w.dtype)  # (Bp, 3H)
    nt = Vp // TV
    cost = pl.CostEstimate(
        flops=2 * Bp * 3 * H * Vp,
        transcendentals=0,
        bytes_accessed=(w.size * w.dtype.itemsize
                        + act.size * act.dtype.itemsize
                        + Bp * Vp * 4))

    logits_p = pl.pallas_call(
        out_proj_kernel,
        out_shape=jax.ShapeDtypeStruct((Bp, Vp), jnp.float32),
        grid=(nt,),
        in_specs=[
            pl.BlockSpec((Bp, 3 * H), lambda j: (0, 0)),   # resident across tiles
            pl.BlockSpec((3 * H, TV), lambda j: (0, j)),   # the weight stream
        ],
        out_specs=pl.BlockSpec((Bp, TV), lambda j: (0, j)),
        compiler_params=pltpu.CompilerParams(
            dimension_semantics=("parallel",),             # shards V over v7x's 2 TCs
            vmem_limit_bytes=48 * 1024 * 1024),
        cost_estimate=cost,
    )(act, w)

    # Finish bias + log-softmax on the (B, V) logits in the wrapper (cheap vs.
    # the weight stream; keeps the V grid axis embarrassingly parallel).
    logits = logits_p[:B, :V] + prepared["out_b"][None, :]
    log_probs = jax.nn.log_softmax(logits, axis=1)

    hidden = h_new[:B][None, ...]                               # (1, B, H)
    # Attention weights are exactly uniform in the original module.
    attn_weights = jnp.full((B, 1, L), 1.0 / L, dtype=jnp.float32)
    return log_probs, hidden, attn_weights


# ---------------------------------------------------------------------------
# Pure-JAX reference: evaluates the FULL PyTorch formula (including the dead
# attention math) to prove the optimized kernels are numerically equivalent.
# ---------------------------------------------------------------------------
def decoder_reference(x_tokens, h, encoder_out, params):
    B, L, _ = encoder_out.shape
    H = h.shape[-1]
    x_emb = params["embedding"][x_tokens[:, 0]]
    last_hidden = h[-1]

    cat = jnp.concatenate(
        [jnp.broadcast_to(last_hidden[:, None, :], (B, L, H)), encoder_out], axis=-1)
    scores = jnp.einsum("blk,ok->blo", cat, params["attn_w"]) + params["attn_b"]  # (B,L,1)
    betas = jax.nn.softmax(scores, axis=-1)[..., 0]              # singleton softmax -> ones
    attn_w = jax.nn.softmax(betas, axis=1)                       # (B, L) uniform
    context = jnp.einsum("bl,bld->bd", attn_w, encoder_out)

    rnn_in = jnp.concatenate([x_emb, context], axis=1)
    gi = rnn_in @ params["gru_w_ih"].T + params["gru_b_ih"]
    gh = last_hidden @ params["gru_w_hh"].T + params["gru_b_hh"]
    r = jax.nn.sigmoid(gi[:, :H] + gh[:, :H])
    z = jax.nn.sigmoid(gi[:, H:2 * H] + gh[:, H:2 * H])
    n = jnp.tanh(gi[:, 2 * H:] + r * gh[:, 2 * H:])
    h_new = (1.0 - z) * n + z * last_hidden

    out_in = jnp.concatenate([h_new, context], axis=1)
    logits = out_in @ params["out_w"].T + params["out_b"]
    log_probs = jax.nn.log_softmax(logits, axis=1)
    return log_probs, h_new[None, ...], attn_w[:, None, :]


# ---------------------------------------------------------------------------
if __name__ == "__main__":
    # Small shapes consistent with the module's forward.
    B, L = 2, 8            # batch, encoder length
    H = 32                 # hid_dim (encoder_out feature dim is 2H = 64)
    E = 16                 # tar_emb
    V = 64                 # vocab_size
    N_LAYERS = 1

    key = jax.random.PRNGKey(0)
    keys = jax.random.split(key, 12)

    emb = 0.1 * jax.random.normal(keys[0], (V, E), jnp.float32)
    emb = emb.at[0].set(0.0)                                    # padding_idx = 0
    params = {
        "embedding": emb,
        "attn_w":   0.1 * jax.random.normal(keys[1], (1, 3 * H), jnp.float32),
        "attn_b":   0.1 * jax.random.normal(keys[2], (1,), jnp.float32),
        "gru_w_ih": 0.1 * jax.random.normal(keys[3], (3 * H, 2 * H + E), jnp.float32),
        "gru_w_hh": 0.1 * jax.random.normal(keys[4], (3 * H, H), jnp.float32),
        "gru_b_ih": 0.1 * jax.random.normal(keys[5], (3 * H,), jnp.float32),
        "gru_b_hh": 0.1 * jax.random.normal(keys[6], (3 * H,), jnp.float32),
        "out_w":    0.1 * jax.random.normal(keys[7], (V, 3 * H), jnp.float32),
        "out_b":    0.1 * jax.random.normal(keys[8], (V,), jnp.float32),
    }

    x_tokens = jax.random.randint(keys[9], (B, 1), 0, V, jnp.int32)
    h0 = 0.1 * jax.random.normal(keys[10], (N_LAYERS, B, H), jnp.float32)
    encoder_out = 0.1 * jax.random.normal(keys[11], (B, L, 2 * H), jnp.float32)

    # One-time weight prep (hoisted); bf16 weight stream is the production path.
    prepared = prepare_decoder_params(params, proj_dtype=jnp.bfloat16)

    log_probs, hidden, attn_weights = decoder_forward(x_tokens, h0, encoder_out, prepared)
    jax.block_until_ready((log_probs, hidden, attn_weights))

    # sanity check against the full (un-optimized, f32) pure-JAX reference
    ref_lp, ref_h, ref_aw = decoder_reference(x_tokens, h0, encoder_out, params)
    assert log_probs.shape == (B, V) and hidden.shape == (N_LAYERS, B, H)
    assert attn_weights.shape == (B, 1, L)
    # log-probs go through the bf16 weight stream -> bf16-level tolerance
    assert jnp.allclose(log_probs, ref_lp, atol=5e-3, rtol=1e-3)
    # hidden state is an all-f32 path -> tight tolerance
    assert jnp.allclose(hidden, ref_h, atol=2e-4, rtol=1e-4)
    assert jnp.allclose(attn_weights, ref_aw, atol=1e-5, rtol=1e-4)

    print("KERNEL_OK")
</pallas_src>

<mosaic_0001>
module attributes {stable_mosaic.version = 11 : i64} {
  func.func @gru_step_kernel(%arg0: memref<8x16xf32, #tpu.memory_space<vmem>>, %arg1: memref<8x32xf32, #tpu.memory_space<vmem>>, %arg2: memref<8x64xf32, #tpu.memory_space<vmem>>, %arg3: memref<16x96xf32, #tpu.memory_space<vmem>>, %arg4: memref<64x96xf32, #tpu.memory_space<vmem>>, %arg5: memref<32x96xf32, #tpu.memory_space<vmem>>, %arg6: memref<1x96xf32, #tpu.memory_space<vmem>>, %arg7: memref<1x96xf32, #tpu.memory_space<vmem>>, %arg8: memref<8x32xf32, #tpu.memory_space<vmem>>) attributes {dimension_semantics = [], scalar_prefetch = 0 : i64, scratch_operands = 0 : i64, tpu.core_type = #tpu.core_type<tc>} {
    %c0 = arith.constant 0 : index
    %c0_0 = arith.constant 0 : index
    %0 = vector.load %arg0[%c0, %c0_0] : memref<8x16xf32, #tpu.memory_space<vmem>>, vector<8x16xf32>
    %c0_1 = arith.constant 0 : index
    %c0_2 = arith.constant 0 : index
    %1 = vector.load %arg1[%c0_1, %c0_2] : memref<8x32xf32, #tpu.memory_space<vmem>>, vector<8x32xf32>
    %c0_3 = arith.constant 0 : index
    %c0_4 = arith.constant 0 : index
    %2 = vector.load %arg2[%c0_3, %c0_4] : memref<8x64xf32, #tpu.memory_space<vmem>>, vector<8x64xf32>
    %c0_5 = arith.constant 0 : index
    %c0_6 = arith.constant 0 : index
    %3 = vector.load %arg3[%c0_5, %c0_6] : memref<16x96xf32, #tpu.memory_space<vmem>>, vector<16x96xf32>
    %cst = arith.constant dense<0.000000e+00> : vector<8x96xf32>
    %4 = tpu.matmul %0, %3, %cst {dimension_numbers = #tpu.dot_dimension_numbers<[1], [0], [0], [1], [0, 0, 1, 1], [], []>} : vector<8x16xf32>, vector<16x96xf32>, vector<8x96xf32> -> vector<8x96xf32>
    %c0_7 = arith.constant 0 : index
    %c0_8 = arith.constant 0 : index
    %5 = vector.load %arg4[%c0_7, %c0_8] : memref<64x96xf32, #tpu.memory_space<vmem>>, vector<64x96xf32>
    %cst_9 = arith.constant dense<0.000000e+00> : vector<8x96xf32>
    %6 = tpu.matmul %2, %5, %cst_9 {dimension_numbers = #tpu.dot_dimension_numbers<[1], [0], [0], [1], [0, 0, 1, 1], [], []>} : vector<8x64xf32>, vector<64x96xf32>, vector<8x96xf32> -> vector<8x96xf32>
    %7 = arith.addf %4, %6 : vector<8x96xf32>
    %c0_10 = arith.constant 0 : index
    %c0_11 = arith.constant 0 : index
    %8 = vector.load %arg6[%c0_10, %c0_11] : memref<1x96xf32, #tpu.memory_space<vmem>>, vector<1x96xf32>
    %9 = vector.broadcast %8 : vector<1x96xf32> to vector<8x96xf32>
    %10 = arith.addf %7, %9 : vector<8x96xf32>
    %c0_12 = arith.constant 0 : index
    %c0_13 = arith.constant 0 : index
    %11 = vector.load %arg5[%c0_12, %c0_13] : memref<32x96xf32, #tpu.memory_space<vmem>>, vector<32x96xf32>
    %cst_14 = arith.constant dense<0.000000e+00> : vector<8x96xf32>
    %12 = tpu.matmul %1, %11, %cst_14 {dimension_numbers = #tpu.dot_dimension_numbers<[1], [0], [0], [1], [0, 0, 1, 1], [], []>} : vector<8x32xf32>, vector<32x96xf32>, vector<8x96xf32> -> vector<8x96xf32>
    %c0_15 = arith.constant 0 : index
    %c0_16 = arith.constant 0 : index
    %13 = vector.load %arg7[%c0_15, %c0_16] : memref<1x96xf32, #tpu.memory_space<vmem>>, vector<1x96xf32>
    %14 = vector.broadcast %13 : vector<1x96xf32> to vector<8x96xf32>
    %15 = arith.addf %12, %14 : vector<8x96xf32>
    %16 = vector.extract_strided_slice %10 {offsets = [0, 0], sizes = [8, 32], strides = [1, 1]} : vector<8x96xf32> to vector<8x32xf32>
    %17 = vector.extract_strided_slice %15 {offsets = [0, 0], sizes = [8, 32], strides = [1, 1]} : vector<8x96xf32> to vector<8x32xf32>
    %18 = arith.addf %16, %17 : vector<8x32xf32>
    %19 = arith.negf %18 : vector<8x32xf32>
    %20 = math.exp %19 : vector<8x32xf32>
    %cst_17 = arith.constant 1.000000e+00 : f32
    %21 = vector.broadcast %cst_17 : f32 to vector<8x32xf32>
    %22 = arith.addf %21, %20 : vector<8x32xf32>
    %23 = arith.divf %21, %22 : vector<8x32xf32>
    %24 = vector.extract_strided_slice %10 {offsets = [0, 32], sizes = [8, 32], strides = [1, 1]} : vector<8x96xf32> to vector<8x32xf32>
    %25 = vector.extract_strided_slice %15 {offsets = [0, 32], sizes = [8, 32], strides = [1, 1]} : vector<8x96xf32> to vector<8x32xf32>
    %26 = arith.addf %24, %25 : vector<8x32xf32>
    %27 = arith.negf %26 : vector<8x32xf32>
    %28 = math.exp %27 : vector<8x32xf32>
    %cst_18 = arith.constant 1.000000e+00 : f32
    %29 = vector.broadcast %cst_18 : f32 to vector<8x32xf32>
    %30 = arith.addf %29, %28 : vector<8x32xf32>
    %31 = arith.divf %29, %30 : vector<8x32xf32>
    %32 = vector.extract_strided_slice %10 {offsets = [0, 64], sizes = [8, 32], strides = [1, 1]} : vector<8x96xf32> to vector<8x32xf32>
    %33 = vector.extract_strided_slice %15 {offsets = [0, 64], sizes = [8, 32], strides = [1, 1]} : vector<8x96xf32> to vector<8x32xf32>
    %34 = arith.mulf %23, %33 : vector<8x32xf32>
    %35 = arith.addf %32, %34 : vector<8x32xf32>
    %36 = math.tanh %35 : vector<8x32xf32>
    %cst_19 = arith.constant 1.000000e+00 : f32
    %37 = vector.broadcast %cst_19 : f32 to vector<8x32xf32>
    %38 = arith.subf %37, %31 : vector<8x32xf32>
    %39 = arith.mulf %38, %36 : vector<8x32xf32>
    %40 = arith.mulf %31, %1 : vector<8x32xf32>
    %41 = arith.addf %39, %40 : vector<8x32xf32>
    %c0_20 = arith.constant 0 : index
    %c0_21 = arith.constant 0 : index
    %42 = vector.load %arg8[%c0_20, %c0_21] : memref<8x32xf32, #tpu.memory_space<vmem>>, vector<8x32xf32>
    tpu.vector_store %arg8[%c0_20, %c0_21], %41 {strides = array<i32>} : memref<8x32xf32, #tpu.memory_space<vmem>>, vector<8x32xf32>,
    return
  }
}

</mosaic_0001>

<llo_original>
// kernel: tpu_custom_call.1
$region0: #{tpu_custom_call.1}
  #allocation0 [shape = 'u32[]', space=smem, size = 0x4, offset = 0x4, fixed_abs, tag = 'smem constant byte address 0x4 - core index']
  #allocation1 [shape = 'u32[72,128]{1,0:T(1,128)}', space=vmem, size = 0x9000, scoped, tag = 'internal scratch']
  %s0 = inlined_call_operand.hbm [shape: f32[8,16], index: 0, kind: input, shape index: {}]
  %s1 = inlined_call_operand.hbm [shape: f32[8,32], index: 1, kind: input, shape index: {}]
  %s2 = inlined_call_operand.hbm [shape: f32[8,64], index: 2, kind: input, shape index: {}]
  %s3 = inlined_call_operand.hbm [shape: f32[16,96], index: 3, kind: input, shape index: {}]
  %s4 = inlined_call_operand.hbm [shape: f32[64,96], index: 4, kind: input, shape index: {}]
  %s5 = inlined_call_operand.hbm [shape: f32[32,96], index: 5, kind: input, shape index: {}]
  %s6 = inlined_call_operand.vmem [shape: f32[1,96], index: 6, kind: input, shape index: {}]
  %s7 = inlined_call_operand.vmem [shape: f32[1,96], index: 7, kind: input, shape index: {}]
  %s8 = inlined_call_operand.hbm [shape: f32[8,32], index: 8, kind: output, shape index: {}]
  %s9 = sld [smem:[#allocation0]]
  $region66: #{tpu_custom_call.1} parent=0
    _
  %s11 = ssub.s32 1, %s9
  %s12 = scalar_select 0, %s11, %s9
  $region1: #{tpu_custom_call.1} parent=0
    #allocation2 [shape = 'u8[4096]{0}', space=vmem, size = 0x1000, scoped, tag = 'input window, operand 0, single buffered']
    #allocation3 [shape = 's32[1]{0}', space=sflag, size = 0x4, scoped, tag = 'scoped memory for tpu_custom_call.1']
    #allocation4 [shape = 's32[1]{0}', space=sflag, size = 0x4, scoped, tag = 'scoped memory for tpu_custom_call.1']
    #allocation5 [shape = 'u8[4096]{0}', space=vmem, size = 0x1000, scoped, tag = 'input window, operand 1, single buffered']
    #allocation6 [shape = 's32[1]{0}', space=sflag, size = 0x4, scoped, tag = 'scoped memory for tpu_custom_call.1']
    #allocation7 [shape = 'u8[4096]{0}', space=vmem, size = 0x1000, scoped, tag = 'input window, operand 2, single buffered']
    #allocation8 [shape = 'u8[8192]{0}', space=vmem, size = 0x2000, scoped, tag = 'input window, operand 3, single buffered']
    #allocation9 [shape = 's32[1]{0}', space=sflag, size = 0x4, scoped, tag = 'scoped memory for tpu_custom_call.1']
    #allocation10 [shape = 'u8[32768]{0}', space=vmem, size = 0x8000, scoped, tag = 'input window, operand 4, single buffered']
    #allocation11 [shape = 'u8[16384]{0}', space=vmem, size = 0x4000, scoped, tag = 'input window, operand 5, single buffered']
    #allocation12 [shape = 's32[1]{0}', space=sflag, size = 0x4, scoped, tag = 'scoped memory for tpu_custom_call.1']
    #allocation13 [shape = 'u8[4096]{0}', space=vmem, size = 0x1000, scoped, tag = 'output window, operand 0, single buffered']
    %13 = vsyncpa [#allocation3], 0
    %14 = vsyncpa [#allocation6], 0
    %15 = vsyncpa [#allocation9], 0
    %16 = vsyncpa [#allocation12], 0
    %17 = vsyncpa [#allocation4], 0
    // Predicated region
    $region2: #{tpu_custom_call.1} parent=1 // pred_check
      _
    $region3: #{tpu_custom_call.1} parent=1 // pred_check_branch
      %19 = sbr.rel (0) target = $region5
    $region4: #{tpu_custom_call.1} parent=1 // pred_region
      %21 = vsyncadd [#allocation3], 0
      %s23 = sshll.u32 %s0, 4
      %s24 = int_to_ptr.hbm [resolvable:$true] %s23
      %s25 = sshll.u32 [#allocation2], 4
      %s26 = int_to_ptr.vmem [resolvable:$true] %s25
      %28 = dma.hbm_to_vmem [thread:$0]  %s24, 128, %s26, [#allocation3]
    $region5: #{tpu_custom_call.1} parent=1 // pred_fallthru
      _
    // Predicated region
    $region6: #{tpu_custom_call.1} parent=1 // pred_check
      _
    $region7: #{tpu_custom_call.1} parent=1 // pred_check_branch
      %30 = sbr.rel (0) target = $region9
    $region8: #{tpu_custom_call.1} parent=1 // pred_region
      %32 = vsyncadd [#allocation6], 0
      %s34 = sshll.u32 %s1, 4
      %s35 = int_to_ptr.hbm [resolvable:$true] %s34
      %s36 = sshll.u32 [#allocation5], 4
      %s37 = int_to_ptr.vmem [resolvable:$true] %s36
      %39 = dma.hbm_to_vmem [thread:$0]  %s35, 128, %s37, [#allocation6]
    $region9: #{tpu_custom_call.1} parent=1 // pred_fallthru
      _
    // Predicated region
    $region10: #{tpu_custom_call.1} parent=1 // pred_check
      _
    $region11: #{tpu_custom_call.1} parent=1 // pred_check_branch
      %41 = sbr.rel (0) target = $region13
    $region12: #{tpu_custom_call.1} parent=1 // pred_region
      %43 = vsyncadd [#allocation6], 0
      %s45 = sshll.u32 %s2, 4
      %s46 = int_to_ptr.hbm [resolvable:$true] %s45
      %s47 = sshll.u32 [#allocation7], 4
      %s48 = int_to_ptr.vmem [resolvable:$true] %s47
      %50 = dma.hbm_to_vmem [thread:$0]  %s46, 128, %s48, [#allocation6]
    $region13: #{tpu_custom_call.1} parent=1 // pred_fallthru
      _
    // Predicated region
    $region14: #{tpu_custom_call.1} parent=1 // pred_check
      _
    $region15: #{tpu_custom_call.1} parent=1 // pred_check_branch
      %52 = sbr.rel (0) target = $region17
    $region16: #{tpu_custom_call.1} parent=1 // pred_region
      %54 = vsyncadd [#allocation9], 0
      %s55 = sshll.u32 %s3, 4
      %s56 = int_to_ptr.hbm [resolvable:$true] %s55
      %s57 = sshll.u32 [#allocation8], 4
      %s58 = int_to_ptr.vmem [resolvable:$true] %s57
      %63 = dma.hbm_to_vmem [thread:$0]  %s56, 256, %s58, [#allocation9], 128, 128, 8
    $region17: #{tpu_custom_call.1} parent=1 // pred_fallthru
      _
    // Predicated region
    $region18: #{tpu_custom_call.1} parent=1 // pred_check
      _
    $region19: #{tpu_custom_call.1} parent=1 // pred_check_branch
      %65 = sbr.rel (0) target = $region21
    $region20: #{tpu_custom_call.1} parent=1 // pred_region
      %67 = vsyncadd [#allocation9], 0
      %s68 = sshll.u32 %s4, 4
      %s69 = int_to_ptr.hbm [resolvable:$true] %s68
      %s70 = sshll.u32 [#allocation10], 4
      %s71 = int_to_ptr.vmem [resolvable:$true] %s70
      %76 = dma.hbm_to_vmem [thread:$0]  %s69, 1024, %s71, [#allocation9], 128, 128, 8
    $region21: #{tpu_custom_call.1} parent=1 // pred_fallthru
      _
    // Predicated region
    $region22: #{tpu_custom_call.1} parent=1 // pred_check
      _
    $region23: #{tpu_custom_call.1} parent=1 // pred_check_branch
      %78 = sbr.rel (0) target = $region25
    $region24: #{tpu_custom_call.1} parent=1 // pred_region
      %80 = vsyncadd [#allocation12], 0
      %s81 = sshll.u32 %s5, 4
      %s82 = int_to_ptr.hbm [resolvable:$true] %s81
      %s83 = sshll.u32 [#allocation11], 4
      %s84 = int_to_ptr.vmem [resolvable:$true] %s83
      %89 = dma.hbm_to_vmem [thread:$0]  %s82, 512, %s84, [#allocation12], 128, 128, 8
    $region25: #{tpu_custom_call.1} parent=1 // pred_fallthru
      _
    // Predicated region
    $region26: #{tpu_custom_call.1} parent=1 // pred_check
      _
    $region27: #{tpu_custom_call.1} parent=1 // pred_check_branch
      %91 = sbr.rel (0) target = $region29
    $region28: #{tpu_custom_call.1} parent=1 // pred_region
      _
    $region29: #{tpu_custom_call.1} parent=1 // pred_fallthru
      _
    // Predicated region
    $region30: #{tpu_custom_call.1} parent=1 // pred_check
      _
    $region31: #{tpu_custom_call.1} parent=1 // pred_check_branch
      %93 = sbr.rel (0) target = $region33
    $region32: #{tpu_custom_call.1} parent=1 // pred_region
      _
    $region33: #{tpu_custom_call.1} parent=1 // pred_fallthru
      _
    // Predicated region
    $region34: #{tpu_custom_call.1} parent=1 // pred_check
      _
    $region35: #{tpu_custom_call.1} parent=1 // pred_check_branch
      %95 = sbr.rel (0) target = $region37
    $region36: #{tpu_custom_call.1} parent=1 // pred_region
      %97 = dma.done [#allocation3], 128
    $region37: #{tpu_custom_call.1} parent=1 // pred_fallthru
      _
    // Predicated region
    $region38: #{tpu_custom_call.1} parent=1 // pred_check
      _
    $region39: #{tpu_custom_call.1} parent=1 // pred_check_branch
      %99 = sbr.rel (0) target = $region41
    $region40: #{tpu_custom_call.1} parent=1 // pred_region
      %101 = dma.done [#allocation6], 128
    $region41: #{tpu_custom_call.1} parent=1 // pred_fallthru
      _
    // Predicated region
    $region42: #{tpu_custom_call.1} parent=1 // pred_check
      _
    $region43: #{tpu_custom_call.1} parent=1 // pred_check_branch
      %103 = sbr.rel (0) target = $region45
    $region44: #{tpu_custom_call.1} parent=1 // pred_region
      %105 = dma.done [#allocation6], 128
    $region45: #{tpu_custom_call.1} parent=1 // pred_fallthru
      _
    // Predicated region
    $region46: #{tpu_custom_call.1} parent=1 // pred_check
      _
    $region47: #{tpu_custom_call.1} parent=1 // pred_check_branch
      %107 = sbr.rel (0) target = $region49
    $region48: #{tpu_custom_call.1} parent=1 // pred_region
      %109 = dma.done [#allocation9], 256
    $region49: #{tpu_custom_call.1} parent=1 // pred_fallthru
      _
    // Predicated region
    $region50: #{tpu_custom_call.1} parent=1 // pred_check
      _
    $region51: #{tpu_custom_call.1} parent=1 // pred_check_branch
      %111 = sbr.rel (0) target = $region53
    $region52: #{tpu_custom_call.1} parent=1 // pred_region
      %113 = dma.done [#allocation9], 1024
    $region53: #{tpu_custom_call.1} parent=1 // pred_fallthru
      _
    // Predicated region
    $region54: #{tpu_custom_call.1} parent=1 // pred_check
      _
    $region55: #{tpu_custom_call.1} parent=1 // pred_check_branch
      %115 = sbr.rel (0) target = $region57
    $region56: #{tpu_custom_call.1} parent=1 // pred_region
      %117 = dma.done [#allocation12], 512
    $region57: #{tpu_custom_call.1} parent=1 // pred_fallthru
      _
    %v118 = vld [vmem:[#allocation2] sm:$0xff]
    %v119 = vld [vmem:[#allocation5] sm:$0xff]
    %v120 = vld [vmem:[#allocation7] sm:$0xff]
    %v121 = vld [vmem:[#allocation8] sm:$0xff]
    %v122 = vld [vmem:[#allocation8 + $0x8] sm:$0xff]
    %v123 = vld [vmem:[#allocation10] sm:$0xff]
    %v124 = vld [vmem:[#allocation10 + $0x8] sm:$0xff]
    %v125 = vld [vmem:[#allocation10 + $0x10] sm:$0xff]
    %v126 = vld [vmem:[#allocation10 + $0x18] sm:$0xff]
    %v127 = vld [vmem:[#allocation10 + $0x20] sm:$0xff]
    %v128 = vld [vmem:[#allocation10 + $0x28] sm:$0xff]
    %v129 = vld [vmem:[#allocation10 + $0x30] sm:$0xff]
    %v130 = vld [vmem:[#allocation10 + $0x38] sm:$0xff]
    %vm131 = vcmask 523264
    %v133 = vsel %vm131, %v120, 0
    %135 = vmatpush.msra.mxu0 0.0
    %136 = vmatpush.msra.mxu0 0.0
    %137 = vmatpush.msra.mxu0 0.0
    %138 = vmatpush.msra.mxu0 0.0
    %139 = vmatpush.msra.mxu0 0.0
    %140 = vmatpush.msra.mxu0 0.0
    %141 = vmatpush.msra.mxu0 0.0
    %142 = vmatpush.msra.mxu0 0.0
    %143 = vmatpush.msra.mxu0 %v130
    %144 = vmatpush.msra.mxu0 %v129
    %145 = vmatpush.msra.mxu0 %v128
    %146 = vmatpush.msra.mxu0 %v127
    %147 = vmatpush.msra.mxu0 %v126
    %148 = vmatpush.msra.mxu0 %v125
    %149 = vmatpush.msra.mxu0 %v124
    %150 = vmatpush.msra.mxu0 %v123
    %151 = vmatmul.f32.gmra.mxu0 %v133
    %v152 = vpop.f32.mrf.mxu0
    %v153 = vadd.f32 0.0, %v152
    %154 = vdwg.mxu0
    %vm155 = vcmask 130048
    %v157 = vsel %vm155, %v118, 0
    %159 = vmatpush.msra.mxu0 0.0
    %160 = vmatpush.msra.mxu0 0.0
    %161 = vmatpush.msra.mxu0 0.0
    %162 = vmatpush.msra.mxu0 0.0
    %163 = vmatpush.msra.mxu0 0.0
    %164 = vmatpush.msra.mxu0 0.0
    %165 = vmatpush.msra.mxu0 0.0
    %166 = vmatpush.msra.mxu0 0.0
    %167 = vmatpush.msra.mxu0 0.0
    %168 = vmatpush.msra.mxu0 0.0
    %169 = vmatpush.msra.mxu0 0.0
    %170 = vmatpush.msra.mxu0 0.0
    %171 = vmatpush.msra.mxu0 0.0
    %172 = vmatpush.msra.mxu0 0.0
    %173 = vmatpush.msra.mxu0 %v122
    %174 = vmatpush.msra.mxu0 %v121
    %175 = vmatmul.f32.gmra.mxu0 %v157
    %v176 = vpop.f32.mrf.mxu0
    %v177 = vadd.f32 %v153, %v176
    %178 = vdwg.mxu0
    %v179 = vld [vmem:[%s6] sm:$0x1]
    %v181 = vperm.slane %v179, 0
    %v183 = vadd.f32 %v177, %v181
    %v184 = vld [vmem:[#allocation11] sm:$0xff]
    %v185 = vld [vmem:[#allocation11 + $0x8] sm:$0xff]
    %v186 = vld [vmem:[#allocation11 + $0x10] sm:$0xff]
    %v187 = vld [vmem:[#allocation11 + $0x18] sm:$0xff]
    %v188 = vld [vmem:[%s7] sm:$0x1]
    %v190 = vperm.slane %v188, 0
    %vm192 = vcmask 261120
    %v194 = vsel %vm192, %v119, 0
    %196 = vmatpush.msra.mxu0 0.0
    %197 = vmatpush.msra.mxu0 0.0
    %198 = vmatpush.msra.mxu0 0.0
    %199 = vmatpush.msra.mxu0 0.0
    %200 = vmatpush.msra.mxu0 0.0
    %201 = vmatpush.msra.mxu0 0.0
    %202 = vmatpush.msra.mxu0 0.0
    %203 = vmatpush.msra.mxu0 0.0
    %204 = vmatpush.msra.mxu0 0.0
    %205 = vmatpush.msra.mxu0 0.0
    %206 = vmatpush.msra.mxu0 0.0
    %207 = vmatpush.msra.mxu0 0.0
    %208 = vmatpush.msra.mxu0 %v187
    %209 = vmatpush.msra.mxu0 %v186
    %210 = vmatpush.msra.mxu0 %v185
    %211 = vmatpush.msra.mxu0 %v184
    %212 = vmatmul.f32.gmra.mxu0 %v194
    %v213 = vpop.f32.mrf.mxu0
    %v214 = vadd.f32 %v190, %v213
    %215 = vdwg.mxu0
    %v216 = vadd.f32 %v183, %v214
    %v217 = vxor.u32 %v216, 2147483648
    %v218 = vmul.f32 %v217, 1.442695
    %v219 = vpow.pop %v218
    %v220 = vadd.f32 %v219, 1.0
    %v221 = vrcp.pop %v220
    %v222 = vmul.f32 %v220, %v221
    %v223 = vsub.f32 1.0, %v222
    %v224 = vmul.f32 %v221, %v223
    %v225 = vadd.f32 %v221, %v224
    %vm226 = vweird.f32 %v220
    %vm227 = vweird.f32 %v221
    %vm228 = vmor %vm226, %vm227
    %v229 = vsel %vm228, %v221, %v225
    %v230 = vand.u32 2147483647, %v220
    %vm231 = vcmp.eq.f32.partialorder %v230, 8.507059e+37
    %v232 = vand.u32 %v220, 2147483648
    %v233 = vor.u32 1.1754944e-38, %v232
    %v234 = vsel %vm231, %v233, %v229
    %v235 = vmul.f32 1.0, %v234
    %237 = vrot.lane.b32.xlu0 %v214, 64
    %v238 = vpop.permute.xlu0 %237
    %v240 = vmul.f32 %v235, %v238
    %242 = vrot.lane.b32.xlu0 %v240, 64
    %v243 = vpop.permute.xlu0 %242
    %v245 = vadd.f32 %v183, %v243
    %v246 = vtanh.pop %v245
    %v247 = vsub.f32 1.0, %v235
    %249 = vrot.lane.b32.xlu0 %v246, 96
    %v250 = vpop.permute.xlu0 %249
    %v252 = vmul.f32 %v247, %v250
    %253 = vrot.lane.b32.xlu0 %v119, 32
    %v254 = vpop.permute.xlu0 %253
    %v256 = vmul.f32 %v235, %v254
    %v257 = vadd.f32 %v252, %v256
    %259 = vrot.lane.b32.xlu0 %v257, 96
    %v260 = vpop.permute.xlu0 %259
    %262 = vst.msk [vmem:[#allocation13] sm:$0xff] %vm192, %v260
    // Predicated region
    $region58: #{tpu_custom_call.1} parent=1 // pred_check
      _
    $region59: #{tpu_custom_call.1} parent=1 // pred_check_branch
      %264 = sbr.rel (0) target = $region61
    $region60: #{tpu_custom_call.1} parent=1 // pred_region
      %266 = vsyncadd [#allocation4], 0
      %s268 = sshll.u32 [#allocation13], 4
      %s269 = int_to_ptr.vmem [resolvable:$true] %s268
      %s270 = sshll.u32 %s8, 4
      %s271 = int_to_ptr.hbm [resolvable:$true] %s270
      %273 = dma.vmem_to_hbm [thread:$0]  %s269, 128, %s271, [#allocation4]
    $region61: #{tpu_custom_call.1} parent=1 // pred_fallthru
      _
    // Predicated region
    $region62: #{tpu_custom_call.1} parent=1 // pred_check
      _
    $region63: #{tpu_custom_call.1} parent=1 // pred_check_branch
      %275 = sbr.rel (0) target = $region65
    $region64: #{tpu_custom_call.1} parent=1 // pred_region
      %277 = dma.done [#allocation4], 128
    $region65: #{tpu_custom_call.1} parent=1 // pred_fallthru
      _
    %278 = vsyncpa [#allocation3], 1
    %279 = vsyncpa [#allocation6], 1
    %280 = vsyncpa [#allocation9], 1
    %281 = vsyncpa [#allocation12], 1
    %282 = vsyncpa [#allocation4], 1

</llo_original>
